<compile_context>
chip_gen: v6e
topology: v6e:2x2x1
jax: 0.10.0
libtpu: 0.0.40
codegen_flags: <defaults>
</compile_context>

<pallas_src>
import functools
import math

import jax
import jax.numpy as jnp
from jax.experimental import pallas as pl
from jax.experimental.pallas import tpu as pltpu


def _embed_kernel(ids_ref, table_ref, out_ref, *, scale, vocab):
    # ids_ref:   (T, 1)            int32 per-tile token ids (VMEM block)
    # table_ref: (vocab, d_model)  VMEM-resident embedding table
    # out_ref:   (T, d_model)
    ids = ids_ref[...]                                              # (T, 1)
    tile_t = ids.shape[0]
    col = jax.lax.broadcasted_iota(jnp.int32, (tile_t, vocab), 1)   # (T, vocab)
    one_hot = (col == ids).astype(table_ref.dtype)                  # (T, vocab)
    # Gather on the MXU: one_hot @ table with f32 accumulation.
    rows = jnp.dot(one_hot, table_ref[...],
                   preferred_element_type=jnp.float32)              # (T, d_model)
    out_ref[...] = (rows * scale).astype(out_ref.dtype)


def embeddings_forward(token_ids: jax.Array, table: jax.Array,
                       *, tile_tokens: int = 512) -> jax.Array:
    """token_ids: (B, S) int, table: (vocab, d_model) -> (B, S, d_model)."""
    B, S = token_ids.shape
    vocab, d_model = table.shape
    n_tok = B * S
    itemsize = jnp.dtype(table.dtype).itemsize
    scale = float(math.sqrt(d_model))

    ids = token_ids.reshape(n_tok).astype(jnp.int32)

    # Tile size: multiple of 8, capped by
    #   (a) the requested tile_tokens,
    #   (b) a budget for the (T, vocab) one-hot intermediate (~4 MiB),
    #   (c) the (8-rounded) number of tokens.
    onehot_budget = 4 * 2**20
    t_cap = max(8, onehot_budget // (max(vocab, 1) * 4))
    T = min(tile_tokens, t_cap, ((n_tok + 7) // 8) * 8)
    T = max(8, (T // 8) * 8)

    # Pad token count to a whole number of tiles (padded rows computed then dropped).
    n_pad = pl.cdiv(n_tok, T) * T
    ids_padded = jnp.pad(ids, (0, n_pad - n_tok)).reshape(n_pad, 1)

    grid = (n_pad // T,)

    cost = pl.CostEstimate(
        flops=2 * n_pad * vocab * d_model,
        transcendentals=0,
        bytes_accessed=(n_pad * 4                       # ids
                        + vocab * d_model * itemsize    # table (read once)
                        + n_pad * d_model * itemsize),  # output
    )

    # VMEM budget: (possibly double-buffered) resident table + double-buffered
    # ids/out tiles + headroom for the one-hot intermediate.
    table_vmem = 2 * vocab * d_model * itemsize
    tile_vmem = 2 * (T * 128 * 4 + T * d_model * itemsize) + T * vocab * 4
    vmem_bytes = int(min(64 * 2**20,
                         max(4 * 2**20, table_vmem + tile_vmem + (2 * 2**20))))

    out_padded = pl.pallas_call(
        functools.partial(_embed_kernel, scale=scale, vocab=vocab),
        out_shape=jax.ShapeDtypeStruct((n_pad, d_model), table.dtype),
        grid_spec=pltpu.PrefetchScalarGridSpec(
            num_scalar_prefetch=0,
            grid=grid,
            in_specs=[
                # Per-tile token ids (one id per sublane row).
                pl.BlockSpec((T, 1), lambda i: (i, 0)),
                # Whole table, same block every step -> fetched once, stays in VMEM.
                pl.BlockSpec((vocab, d_model), lambda i: (0, 0)),
            ],
            out_specs=pl.BlockSpec((T, d_model), lambda i: (i, 0)),
        ),
        compiler_params=pltpu.CompilerParams(
            dimension_semantics=("parallel",),   # tiles independent -> megacore
            vmem_limit_bytes=vmem_bytes,
        ),
        cost_estimate=cost,
    )(ids_padded, table)

    return out_padded[:n_tok].reshape(B, S, d_model)


if __name__ == "__main__":
    # Small deterministic setup consistent with the module's forward:
    #   d_model=32, vocab_size=64, batch=2, seq_len=8
    d_model = 32
    vocab_size = 64
    B, S = 2, 8

    key = jax.random.PRNGKey(0)
    k_tab, k_ids = jax.random.split(key)

    # Deterministic "weights" for nn.Embedding (normal init, PyTorch default).
    table = jax.random.normal(k_tab, (vocab_size, d_model), dtype=jnp.float32)
    token_ids = jax.random.randint(k_ids, (B, S), 0, vocab_size, dtype=jnp.int32)

    out = jax.block_until_ready(embeddings_forward(token_ids, table))

    # Pure-JAX reference of the forward semantics.
    ref = jnp.take(table, token_ids, axis=0) * math.sqrt(d_model)
    assert out.shape == (B, S, d_model)
    assert jnp.allclose(out, ref, atol=1e-5, rtol=1e-5)

    print("KERNEL_OK")
</pallas_src>

<mosaic_0001>
module attributes {stable_mosaic.version = 11 : i64} {
  func.func @_embed_kernel(%arg0: i32, %arg1: memref<16x1xi32, #tpu.memory_space<vmem>>, %arg2: memref<64x32xf32, #tpu.memory_space<vmem>>, %arg3: memref<16x32xf32, #tpu.memory_space<vmem>>) attributes {dimension_semantics = [#tpu.dimension_semantics<parallel>], iteration_bounds = array<i64: 1>, scalar_prefetch = 0 : i64, scratch_operands = 0 : i64, tpu.core_type = #tpu.core_type<tc>, window_params = [{transform_indices = @transform_0, window_bounds = array<i64: 16, 1>}, {pipeline_mode = #tpu.pipeline_mode<synchronous>, transform_indices = @transform_1, window_bounds = array<i64: 64, 32>}, {transform_indices = @transform_2, window_bounds = array<i64: 16, 32>}]} {
    %c0 = arith.constant 0 : index
    %c0_0 = arith.constant 0 : index
    %0 = vector.load %arg1[%c0, %c0_0] : memref<16x1xi32, #tpu.memory_space<vmem>>, vector<16x1xi32>
    %1 = tpu.iota {dimensions = array<i32: 1>} : vector<16x64xi32>
    %2 = vector.broadcast %0 : vector<16x1xi32> to vector<16x64xi32>
    %3 = arith.cmpi eq, %1, %2 : vector<16x64xi32>
    %4 = arith.extui %3 : vector<16x64xi1> to vector<16x64xi32>
    %5 = arith.sitofp %4 : vector<16x64xi32> to vector<16x64xf32>
    %c0_1 = arith.constant 0 : index
    %c0_2 = arith.constant 0 : index
    %6 = vector.load %arg2[%c0_1, %c0_2] : memref<64x32xf32, #tpu.memory_space<vmem>>, vector<64x32xf32>
    %cst = arith.constant dense<0.000000e+00> : vector<16x32xf32>
    %7 = tpu.matmul %5, %6, %cst {dimension_numbers = #tpu.dot_dimension_numbers<[1], [0], [0], [1], [0, 0, 1, 1], [], []>} : vector<16x64xf32>, vector<64x32xf32>, vector<16x32xf32> -> vector<16x32xf32>
    %cst_3 = arith.constant 5.65685415 : f32
    %8 = vector.broadcast %cst_3 : f32 to vector<16x32xf32>
    %9 = arith.mulf %7, %8 : vector<16x32xf32>
    %c0_4 = arith.constant 0 : index
    %c0_5 = arith.constant 0 : index
    %10 = vector.load %arg3[%c0_4, %c0_5] : memref<16x32xf32, #tpu.memory_space<vmem>>, vector<16x32xf32>
    tpu.vector_store %arg3[%c0_4, %c0_5], %9 {strides = array<i32>} : memref<16x32xf32, #tpu.memory_space<vmem>>, vector<16x32xf32>,
    return
  }
  func.func @transform_0(%arg0: i32) -> (i32, i32) {
    %c0_i32 = arith.constant 0 : i32
    %c0_i32_0 = arith.constant 0 : i32
    return %arg0, %c0_i32 : i32, i32
  }
  func.func @transform_1(%arg0: i32) -> (i32, i32) {
    %c0_i32 = arith.constant 0 : i32
    %c0_i32_0 = arith.constant 0 : i32
    %c0_i32_1 = arith.constant 0 : i32
    return %c0_i32, %c0_i32_0 : i32, i32
  }
  func.func @transform_2(%arg0: i32) -> (i32, i32) {
    %c0_i32 = arith.constant 0 : i32
    %c0_i32_0 = arith.constant 0 : i32
    return %arg0, %c0_i32 : i32, i32
  }
}

</mosaic_0001>

<llo_original>
// kernel: tpu_custom_call.1
$region0: #{tpu_custom_call.1}
  #allocation0 [shape = 'u32[]', space=smem, size = 0x4, offset = 0x4, fixed_abs, tag = 'smem constant byte address 0x4 - core index']
  #allocation1 [shape = 'u32[144,128]{1,0:T(1,128)}', space=vmem, size = 0x12000, scoped, tag = 'internal scratch']
  %s0 = inlined_call_operand.vmem [shape: s32[16,1], index: 0, kind: input, shape index: {}]
  %s1 = inlined_call_operand.vmem [shape: f32[64,32], index: 1, kind: input, shape index: {}]
  %s2 = inlined_call_operand.hbm [shape: f32[16,32], index: 2, kind: output, shape index: {}]
  %s3 = sld [smem:[#allocation0]]
  $region18: #{tpu_custom_call.1} parent=0
    _
  %s5 = ssub.s32 1, %s3
  %s6 = scalar_select 0, %s5, %s3
  $region1: #{tpu_custom_call.1} parent=0
    #allocation2 [shape = 'u8[8192]{0}', space=vmem, size = 0x2000, scoped, tag = 'output window, operand 0, single buffered']
    #allocation3 [shape = 's32[1]{0}', space=sflag, size = 0x4, scoped, tag = 'scoped memory for tpu_custom_call.1']
    %7 = vsyncpa [#allocation3], 0
    // Predicated region
    $region2: #{tpu_custom_call.1} parent=1 // pred_check
      _
    $region3: #{tpu_custom_call.1} parent=1 // pred_check_branch
      %9 = sbr.rel (0) target = $region5
    $region4: #{tpu_custom_call.1} parent=1 // pred_region
      _
    $region5: #{tpu_custom_call.1} parent=1 // pred_fallthru
      _
    // Predicated region
    $region6: #{tpu_custom_call.1} parent=1 // pred_check
      _
    $region7: #{tpu_custom_call.1} parent=1 // pred_check_branch
      %11 = sbr.rel (0) target = $region9
    $region8: #{tpu_custom_call.1} parent=1 // pred_region
      _
    $region9: #{tpu_custom_call.1} parent=1 // pred_fallthru
      _
    %v12 = vld [vmem:[%s0] sm:$0xff]
    %v13 = vld [vmem:[%s0 + $0x8] sm:$0xff]
    %v14 = vlaneseq
    %v15 = vand.u32 %v14, 127
    %16 = vset.pattern.permute.xlu0 0
    %17 = vperm.xlu0 %16, %v12
    %v18 = vpop.permute.xlu0 %17
    %19 = vset.pattern.permute.xlu0 0
    %20 = vperm.xlu0 %19, %v13
    %v21 = vpop.permute.xlu0 %20
    %vm22 = vcmp.eq.s32.totalorder %v15, %v18
    %vm23 = vcmp.eq.s32.totalorder %v15, %v21
    %v24 = vsel %vm22, 1, 0
    %v25 = vsel %vm23, 1, 0
    %v26 = vcvt.s32.f32 %v24
    %v27 = vcvt.s32.f32 %v25
    %v28 = vld [vmem:[%s1] sm:$0xff]
    %v29 = vld [vmem:[%s1 + $0x8] sm:$0xff]
    %v30 = vld [vmem:[%s1 + $0x10] sm:$0xff]
    %v31 = vld [vmem:[%s1 + $0x18] sm:$0xff]
    %v32 = vld [vmem:[%s1 + $0x20] sm:$0xff]
    %v33 = vld [vmem:[%s1 + $0x28] sm:$0xff]
    %v34 = vld [vmem:[%s1 + $0x30] sm:$0xff]
    %v35 = vld [vmem:[%s1 + $0x38] sm:$0xff]
    %vm36 = vcmask 523264
    %v38 = vsel %vm36, %v26, 0
    %v41 = vsel %vm36, %v27, 0
    %43 = vmatprep.subr.mxu0 0.0
    %44 = vmatpush1.msra.mxu0 0.0
    %45 = vmatprep.subr.mxu0 0.0
    %46 = vmatpush1.msra.mxu0 0.0
    %47 = vmatprep.subr.mxu0 0.0
    %48 = vmatpush1.msra.mxu0 0.0
    %49 = vmatprep.subr.mxu0 0.0
    %50 = vmatpush1.msra.mxu0 0.0
    %51 = vmatprep.subr.mxu0 0.0
    %52 = vmatpush1.msra.mxu0 0.0
    %53 = vmatprep.subr.mxu0 0.0
    %54 = vmatpush1.msra.mxu0 0.0
    %55 = vmatprep.subr.mxu0 0.0
    %56 = vmatpush1.msra.mxu0 0.0
    %57 = vmatprep.subr.mxu0 0.0
    %58 = vmatpush1.msra.mxu0 0.0
    %59 = vmatprep.subr.mxu0 0.0
    %60 = vmatpush1.msra.mxu0 %v35
    %61 = vmatprep.subr.mxu0 0.0
    %62 = vmatpush1.msra.mxu0 %v34
    %63 = vmatprep.subr.mxu0 0.0
    %64 = vmatpush1.msra.mxu0 %v33
    %65 = vmatprep.subr.mxu0 0.0
    %66 = vmatpush1.msra.mxu0 %v32
    %67 = vmatprep.subr.mxu0 0.0
    %68 = vmatpush1.msra.mxu0 %v31
    %69 = vmatprep.subr.mxu0 0.0
    %70 = vmatpush1.msra.mxu0 %v30
    %71 = vmatprep.subr.mxu0 0.0
    %72 = vmatpush1.msra.mxu0 %v29
    %73 = vmatprep.subr.mxu0 0.0
    %74 = vmatpush1.msra.mxu0 %v28
    %75 = vmatprep.subr.mxu0 0.0
    %76 = vmatpush2.msra.mxu0 0.0
    %77 = vmatprep.subr.mxu0 0.0
    %78 = vmatpush2.msra.mxu0 0.0
    %79 = vmatprep.subr.mxu0 0.0
    %80 = vmatpush2.msra.mxu0 0.0
    %81 = vmatprep.subr.mxu0 0.0
    %82 = vmatpush2.msra.mxu0 0.0
    %83 = vmatprep.subr.mxu0 0.0
    %84 = vmatpush2.msra.mxu0 0.0
    %85 = vmatprep.subr.mxu0 0.0
    %86 = vmatpush2.msra.mxu0 0.0
    %87 = vmatprep.subr.mxu0 0.0
    %88 = vmatpush2.msra.mxu0 0.0
    %89 = vmatprep.subr.mxu0 0.0
    %90 = vmatpush2.msra.mxu0 0.0
    %91 = vmatprep.subr.mxu0 0.0
    %92 = vmatpush2.msra.mxu0 0.0
    %93 = vmatprep.subr.mxu0 0.0
    %94 = vmatpush2.msra.mxu0 0.0
    %95 = vmatprep.subr.mxu0 0.0
    %96 = vmatpush2.msra.mxu0 0.0
    %97 = vmatprep.subr.mxu0 0.0
    %98 = vmatpush2.msra.mxu0 0.0
    %99 = vmatprep.subr.mxu0 0.0
    %100 = vmatpush2.msra.mxu0 0.0
    %101 = vmatprep.subr.mxu0 0.0
    %102 = vmatpush2.msra.mxu0 0.0
    %103 = vmatprep.subr.mxu0 0.0
    %104 = vmatpush2.msra.mxu0 0.0
    %105 = vmatprep.subr.mxu0 0.0
    %106 = vmatpush2.msra.mxu0 0.0
    %107 = vmatprep.mubr.f32.mxu0 0.0
    %108 = vmatmul.mubr.f32.gmra.mxu0 %v38
    %v109 = vpop.f32.mrf.mxu0
    %v110 = vadd.f32 0.0, %v109
    %v111 = vpop.f32.mrf.mxu0
    %112 = vmatprep.mubr.f32.mxu0 0.0
    %113 = vmatmul.mubr.f32.gmra.mxu0 %v41
    %v114 = vpop.f32.mrf.mxu0
    %v115 = vadd.f32 0.0, %v114
    %v116 = vpop.f32.mrf.mxu0
    %117 = vdwg.mxu0
    %v118 = vmul.f32 %v110, 5.656854
    %v119 = vmul.f32 %v115, 5.656854
    %vm120 = vcmask 261120
    %121 = vst.msk [vmem:[#allocation2] sm:$0xff] %vm120, %v118
    %122 = vst.msk [vmem:[#allocation2 + $0x8] sm:$0xff] %vm120, %v119
    // Predicated region
    $region10: #{tpu_custom_call.1} parent=1 // pred_check
      _
    $region11: #{tpu_custom_call.1} parent=1 // pred_check_branch
      %124 = sbr.rel (0) target = $region13
    $region12: #{tpu_custom_call.1} parent=1 // pred_region
      %s126 = ssub.s32 256, 256
      %127 = vsyncadd [#allocation3], %s126
      %s128 = sshll.u32 [#allocation2], 4
      %s129 = int_to_ptr.vmem [resolvable:$true] %s128
      %134 = dma.vmem_to_hbm [thread:$0]  %s129, 256, %s2, [#allocation3], 128, 128, 8
    $region13: #{tpu_custom_call.1} parent=1 // pred_fallthru
      _
    // Predicated region
    $region14: #{tpu_custom_call.1} parent=1 // pred_check
      _
    $region15: #{tpu_custom_call.1} parent=1 // pred_check_branch
      %136 = sbr.rel (0) target = $region17
    $region16: #{tpu_custom_call.1} parent=1 // pred_region
      %137 = dma.done [#allocation3], 256
    $region17: #{tpu_custom_call.1} parent=1 // pred_fallthru
      _
    %138 = vsyncpa [#allocation3], 1

</llo_original>
